<compile_context>
chip_gen: v7x
topology: tpu7x:2x2x1
jax: 0.10.0
libtpu: 0.0.40
codegen_flags: <defaults>
</compile_context>

<pallas_src>
import functools
import math

import jax
import jax.numpy as jnp
from jax.experimental import pallas as pl
from jax.experimental.pallas import tpu as pltpu

LANES = 128


def _log_poisson_kernel(x_ref, z_ref, y_ref, *, N0, mu):
    """One (block_rows, 128) tile: k ~= Poisson(N0*exp(-mu*x)) via Gaussian approx, then log transform."""
    log_N0 = math.log(N0)      # folded Python constants (no vector divide in the epilogue)
    inv_mu = 1.0 / mu

    x = x_ref[...].astype(jnp.float32)
    z = z_ref[...]

    lam = N0 * jnp.exp(-x * mu)

    # Gaussian approximation of Poisson(lam), valid for lam >> 1 (lam ~ 1000 here).
    # TODO(synk): for parameter regimes with lam < ~30 (large mu*x or small N0), add an
    # exact small-rate Poisson sampler fallback; the normal approximation degrades there.
    k = jnp.floor(lam + jnp.sqrt(lam) * z + 0.5)
    k = jnp.maximum(k, 0.0)    # clamp rounding below zero; k == 0 -> y = +inf (torch semantics)

    # y = -log(k / N0) / mu  ==  (log(N0) - log(k)) * (1 / mu)
    y_ref[...] = ((log_N0 - jnp.log(k)) * inv_mu).astype(y_ref.dtype)


def log_poisson_noise(x, *, N0=1024.0, mu=1.0 / 50.0, seed=0, tile_rows=512):
    """JAX/Pallas equivalent of LogPoissonNoise.forward(x). x is NCHW (any shape works)."""
    orig_shape = x.shape
    orig_dtype = x.dtype
    flat = x.reshape(-1).astype(jnp.float32)
    n = flat.size

    rows = pl.cdiv(n, LANES)
    # Block rows must be a multiple of 8 (f32 sublane tile); cap at the (rounded) array size.
    block_rows = min(int(tile_rows), ((rows + 7) // 8) * 8)
    rows_padded = pl.cdiv(rows, block_rows) * block_rows
    pad = rows_padded * LANES - n
    if pad:
        flat = jnp.concatenate([flat, jnp.zeros((pad,), jnp.float32)])
    x2 = flat.reshape(rows_padded, LANES)

    # One standard normal per element, from the counter-based JAX PRNG (decorrelated from
    # the seed via fold_in so consecutive caller seeds do not alias tile streams).
    # TODO(synk): draw these in-kernel with pltpu.prng_random_bits on real TPU to save one
    # HBM read; kept external so the kernel also runs under the Pallas interpreter.
    z_key = jax.random.fold_in(jax.random.PRNGKey(int(seed)), 0x1F2E3D4C)
    z2 = jax.random.normal(z_key, (rows_padded, LANES), dtype=jnp.float32)

    kernel = functools.partial(_log_poisson_kernel, N0=float(N0), mu=float(mu))

    y2 = pl.pallas_call(
        kernel,
        out_shape=jax.ShapeDtypeStruct((rows_padded, LANES), jnp.float32),
        grid=(rows_padded // block_rows,),
        in_specs=[
            pl.BlockSpec((block_rows, LANES), lambda i: (i, 0)),
            pl.BlockSpec((block_rows, LANES), lambda i: (i, 0)),
        ],
        out_specs=pl.BlockSpec((block_rows, LANES), lambda i: (i, 0)),
        compiler_params=pltpu.CompilerParams(
            # Tiles are fully independent -> megacore-shardable (2x on v7x, free on v5e/v6e).
            dimension_semantics=("parallel",),
        ),
    )(x2, z2)

    y = y2.reshape(-1)[:n].reshape(orig_shape)
    return y.astype(orig_dtype)


if __name__ == "__main__":
    # Deterministic module parameters (LogPoissonNoise.__init__ defaults).
    N0 = 1024.0
    mu = 1.0 / 50.0

    key = jax.random.PRNGKey(0)
    x = jax.random.uniform(key, (2, 4, 16, 16), dtype=jnp.float32)  # NCHW, like torch.rand

    y = log_poisson_noise(x, N0=N0, mu=mu, seed=0)
    y = jax.block_until_ready(y)

    assert y.shape == x.shape and y.dtype == x.dtype
    assert bool(jnp.all(jnp.isfinite(y)))
    # Sanity: per-element noise std ~ 1/(mu*sqrt(N0*exp(-mu*x))) ~ 1.6 for these params,
    # so noisy measurements should stay within a few std-devs of x.
    assert float(jnp.max(jnp.abs(y - x))) < 20.0

    print("KERNEL_OK")
</pallas_src>

<mosaic_0001>
module attributes {stable_mosaic.version = 11 : i64} {
  func.func @_log_poisson_kernel(%arg0: i32, %arg1: memref<16x128xf32, #tpu.memory_space<vmem>>, %arg2: memref<16x128xf32, #tpu.memory_space<vmem>>, %arg3: memref<16x128xf32, #tpu.memory_space<vmem>>) attributes {dimension_semantics = [#tpu.dimension_semantics<parallel>], iteration_bounds = array<i64: 1>, scalar_prefetch = 0 : i64, scratch_operands = 0 : i64, tpu.core_type = #tpu.core_type<tc>, window_params = [{transform_indices = @transform_0, window_bounds = array<i64: 16, 128>}, {transform_indices = @transform_1, window_bounds = array<i64: 16, 128>}, {transform_indices = @transform_2, window_bounds = array<i64: 16, 128>}]} {
    %c0 = arith.constant 0 : index
    %c0_0 = arith.constant 0 : index
    %0 = vector.load %arg1[%c0, %c0_0] : memref<16x128xf32, #tpu.memory_space<vmem>>, vector<16x128xf32>
    %c0_1 = arith.constant 0 : index
    %c0_2 = arith.constant 0 : index
    %1 = vector.load %arg2[%c0_1, %c0_2] : memref<16x128xf32, #tpu.memory_space<vmem>>, vector<16x128xf32>
    %cst = arith.constant 0.000000e+00 : f32
    %2 = vector.broadcast %cst : f32 to vector<16x128xf32>
    %3 = arith.subf %2, %0 : vector<16x128xf32>
    %cst_3 = arith.constant 2.000000e-02 : f32
    %4 = vector.broadcast %cst_3 : f32 to vector<16x128xf32>
    %5 = arith.mulf %3, %4 : vector<16x128xf32>
    %6 = math.exp %5 : vector<16x128xf32>
    %cst_4 = arith.constant 1.024000e+03 : f32
    %7 = vector.broadcast %cst_4 : f32 to vector<16x128xf32>
    %8 = arith.mulf %7, %6 : vector<16x128xf32>
    %9 = math.sqrt %8 : vector<16x128xf32>
    %10 = arith.mulf %9, %1 : vector<16x128xf32>
    %11 = arith.addf %8, %10 : vector<16x128xf32>
    %cst_5 = arith.constant 5.000000e-01 : f32
    %12 = vector.broadcast %cst_5 : f32 to vector<16x128xf32>
    %13 = arith.addf %11, %12 : vector<16x128xf32>
    %14 = math.floor %13 : vector<16x128xf32>
    %cst_6 = arith.constant 0.000000e+00 : f32
    %15 = vector.broadcast %cst_6 : f32 to vector<16x128xf32>
    %16 = arith.maximumf %14, %15 : vector<16x128xf32>
    %17 = math.log %16 : vector<16x128xf32>
    %cst_7 = arith.constant 6.93147182 : f32
    %18 = vector.broadcast %cst_7 : f32 to vector<16x128xf32>
    %19 = arith.subf %18, %17 : vector<16x128xf32>
    %cst_8 = arith.constant 5.000000e+01 : f32
    %20 = vector.broadcast %cst_8 : f32 to vector<16x128xf32>
    %21 = arith.mulf %19, %20 : vector<16x128xf32>
    %c0_9 = arith.constant 0 : index
    %c0_10 = arith.constant 0 : index
    %22 = vector.load %arg3[%c0_9, %c0_10] : memref<16x128xf32, #tpu.memory_space<vmem>>, vector<16x128xf32>
    tpu.vector_store %arg3[%c0_9, %c0_10], %21 {strides = array<i32>} : memref<16x128xf32, #tpu.memory_space<vmem>>, vector<16x128xf32>,
    return
  }
  func.func @transform_0(%arg0: i32) -> (i32, i32) {
    %c0_i32 = arith.constant 0 : i32
    %c0_i32_0 = arith.constant 0 : i32
    return %arg0, %c0_i32 : i32, i32
  }
  func.func @transform_1(%arg0: i32) -> (i32, i32) {
    %c0_i32 = arith.constant 0 : i32
    %c0_i32_0 = arith.constant 0 : i32
    return %arg0, %c0_i32 : i32, i32
  }
  func.func @transform_2(%arg0: i32) -> (i32, i32) {
    %c0_i32 = arith.constant 0 : i32
    %c0_i32_0 = arith.constant 0 : i32
    return %arg0, %c0_i32 : i32, i32
  }
}

</mosaic_0001>

<llo_original>
// kernel: tpu_custom_call.1
$region0: #{tpu_custom_call.1}
  #allocation0 [shape = 'u32[]', space=smem, size = 0x4, offset = 0x4, fixed_abs, tag = 'smem constant byte address 0x4 - core index']
  #allocation1 [shape = 'u32[144,128]{1,0:T(1,128)}', space=vmem, size = 0x12000, scoped, tag = 'internal scratch']
  %s0 = inlined_call_operand.hbm [shape: f32[16,128], index: 0, kind: input, shape index: {}]
  %s1 = inlined_call_operand.hbm [shape: f32[16,128], index: 1, kind: input, shape index: {}]
  %s2 = inlined_call_operand.hbm [shape: f32[16,128], index: 2, kind: output, shape index: {}]
  %s3 = sld [smem:[#allocation0]]
  $region26: #{tpu_custom_call.1} parent=0
    _
  %s5 = ssub.s32 1, %s3
  %s6 = scalar_select 0, %s5, %s3
  $region1: #{tpu_custom_call.1} parent=0
    #allocation2 [shape = 'u8[8192]{0}', space=vmem, size = 0x2000, scoped, tag = 'input window, operand 0, single buffered']
    #allocation3 [shape = 's32[1]{0}', space=sflag, size = 0x4, scoped, tag = 'scoped memory for tpu_custom_call.1']
    #allocation4 [shape = 's32[1]{0}', space=sflag, size = 0x4, scoped, tag = 'scoped memory for tpu_custom_call.1']
    #allocation5 [shape = 'u8[8192]{0}', space=vmem, size = 0x2000, scoped, tag = 'input window, operand 1, single buffered']
    #allocation6 [shape = 's32[1]{0}', space=sflag, size = 0x4, scoped, tag = 'scoped memory for tpu_custom_call.1']
    #allocation7 [shape = 'u8[8192]{0}', space=vmem, size = 0x2000, scoped, tag = 'output window, operand 0, single buffered']
    %7 = vsyncpa [#allocation3], 0
    %8 = vsyncpa [#allocation6], 0
    %9 = vsyncpa [#allocation4], 0
    // Predicated region
    $region2: #{tpu_custom_call.1} parent=1 // pred_check
      _
    $region3: #{tpu_custom_call.1} parent=1 // pred_check_branch
      %11 = sbr.rel (0) target = $region5
    $region4: #{tpu_custom_call.1} parent=1 // pred_region
      %s13 = ssub.s32 256, 256
      %14 = vsyncadd [#allocation3], %s13
      %s15 = sshll.u32 [#allocation2], 4
      %s16 = int_to_ptr.vmem [resolvable:$true] %s15
      %21 = dma.hbm_to_vmem [thread:$0]  %s0, 256, %s16, [#allocation3], 128, 128, 8
    $region5: #{tpu_custom_call.1} parent=1 // pred_fallthru
      _
    // Predicated region
    $region6: #{tpu_custom_call.1} parent=1 // pred_check
      _
    $region7: #{tpu_custom_call.1} parent=1 // pred_check_branch
      %23 = sbr.rel (0) target = $region9
    $region8: #{tpu_custom_call.1} parent=1 // pred_region
      %s25 = ssub.s32 256, 256
      %26 = vsyncadd [#allocation6], %s25
      %s27 = sshll.u32 [#allocation5], 4
      %s28 = int_to_ptr.vmem [resolvable:$true] %s27
      %33 = dma.hbm_to_vmem [thread:$0]  %s1, 256, %s28, [#allocation6], 128, 128, 8
    $region9: #{tpu_custom_call.1} parent=1 // pred_fallthru
      _
    // Predicated region
    $region10: #{tpu_custom_call.1} parent=1 // pred_check
      _
    $region11: #{tpu_custom_call.1} parent=1 // pred_check_branch
      %35 = sbr.rel (0) target = $region13
    $region12: #{tpu_custom_call.1} parent=1 // pred_region
      %36 = dma.done [#allocation3], 256
    $region13: #{tpu_custom_call.1} parent=1 // pred_fallthru
      _
    // Predicated region
    $region14: #{tpu_custom_call.1} parent=1 // pred_check
      _
    $region15: #{tpu_custom_call.1} parent=1 // pred_check_branch
      %38 = sbr.rel (0) target = $region17
    $region16: #{tpu_custom_call.1} parent=1 // pred_region
      %39 = dma.done [#allocation6], 256
    $region17: #{tpu_custom_call.1} parent=1 // pred_fallthru
      _
    %v40 = vld [vmem:[#allocation2] sm:$0xff]
    %v41 = vld [vmem:[#allocation2 + $0x8] sm:$0xff]
    %v42 = vld [vmem:[#allocation5] sm:$0xff]
    %v43 = vld [vmem:[#allocation5 + $0x8] sm:$0xff]
    %v44 = vsub.f32 0.0, %v40
    %v45 = vsub.f32 0.0, %v41
    %v46 = vmul.f32 %v44, 0.02
    %v47 = vmul.f32 %v45, 0.02
    %v48 = vmul.f32 %v46, 1.442695
    %v49 = vpow.pop %v48
    %v50 = vmul.f32 %v47, 1.442695
    %v51 = vpow.pop %v50
    %v52 = vmul.f32 %v49, 1024.0
    %v53 = vmul.f32 %v51, 1024.0
    %v54 = vrsqrt.pop %v52
    %v55 = vmul.f32 %v52, %v54
    %vm56 = vcmp.eq.f32.partialorder %v52, inf
    %v57 = vsel %vm56, %v52, %v55
    %vm58 = vcmp.eq.f32.partialorder %v52, 0.0
    %v59 = vand.u32 %v52, 2147483648
    %v60 = vsel %vm58, %v59, %v57
    %v61 = vrsqrt.pop %v53
    %v62 = vmul.f32 %v53, %v61
    %vm63 = vcmp.eq.f32.partialorder %v53, inf
    %v64 = vsel %vm63, %v53, %v62
    %vm65 = vcmp.eq.f32.partialorder %v53, 0.0
    %v66 = vand.u32 %v53, 2147483648
    %v67 = vsel %vm65, %v66, %v64
    %v68 = vmul.f32 %v60, %v42
    %v69 = vmul.f32 %v67, %v43
    %v70 = vadd.f32 %v52, %v68
    %v71 = vadd.f32 %v53, %v69
    %v72 = vadd.f32 %v70, 0.5
    %v73 = vadd.f32 %v71, 0.5
    %v74 = vfloor.f32 %v72
    %v75 = vfloor.f32 %v73
    %v76 = vmax.f32 %v74, 0.0
    %v77 = vmax.f32 %v75, 0.0
    %v78 = vlog2.pop %v76
    %v79 = vmul.f32 %v78, 0.6931472
    %v80 = vlog2.pop %v77
    %v81 = vmul.f32 %v80, 0.6931472
    %v82 = vsub.f32 6.931472, %v79
    %v83 = vsub.f32 6.931472, %v81
    %v84 = vmul.f32 %v82, 50.0
    %v85 = vmul.f32 %v83, 50.0
    %86 = vst [vmem:[#allocation7] sm:$0xff] %v84
    %87 = vst [vmem:[#allocation7 + $0x8] sm:$0xff] %v85
    // Predicated region
    $region18: #{tpu_custom_call.1} parent=1 // pred_check
      _
    $region19: #{tpu_custom_call.1} parent=1 // pred_check_branch
      %89 = sbr.rel (0) target = $region21
    $region20: #{tpu_custom_call.1} parent=1 // pred_region
      %s91 = ssub.s32 256, 256
      %92 = vsyncadd [#allocation4], %s91
      %s93 = sshll.u32 [#allocation7], 4
      %s94 = int_to_ptr.vmem [resolvable:$true] %s93
      %99 = dma.vmem_to_hbm [thread:$0]  %s94, 256, %s2, [#allocation4], 128, 128, 8
    $region21: #{tpu_custom_call.1} parent=1 // pred_fallthru
      _
    // Predicated region
    $region22: #{tpu_custom_call.1} parent=1 // pred_check
      _
    $region23: #{tpu_custom_call.1} parent=1 // pred_check_branch
      %101 = sbr.rel (0) target = $region25
    $region24: #{tpu_custom_call.1} parent=1 // pred_region
      %102 = dma.done [#allocation4], 256
    $region25: #{tpu_custom_call.1} parent=1 // pred_fallthru
      _
    %103 = vsyncpa [#allocation3], 1
    %104 = vsyncpa [#allocation6], 1
    %105 = vsyncpa [#allocation4], 1

</llo_original>
